<compile_context>
chip_gen: v5e
topology: v5e:2x2
jax: 0.10.0
libtpu: 0.0.40
codegen_flags: <defaults>
</compile_context>

<pallas_src>
import functools

import jax
import jax.numpy as jnp
from jax import lax
from jax.experimental import pallas as pl
from jax.experimental.pallas import tpu as pltpu


_LANES = 128
_SUBLANES = 8
# Target for the double-buffered *input* tiles; leaves headroom under the
# smallest scoped-VMEM default (v5e: 16 MiB) and well under v7x's 64 MiB.
_VMEM_INPUT_BUDGET = 12 * 1024 * 1024


def _round_up(x, m):
    return (x + m - 1) // m * m


def _east_sums_kernel(gs_ref, ps_ref, gg_ref, pg_ref, out_ref, *,
                      rows_valid, apply_mask):
    """Streaming partial-sum kernel.

    Block shapes per grid step (batch dim squeezed away):
      gs_ref, ps_ref : (rows_tile, 128)
      gg_ref, pg_ref : (C, rows_tile, 128)
      out_ref        : (4, 8, 128) f32, resident across the tile axis:
        [0] sum(gt_score)  [1] sum(pred_score)  [2] sum(gt*pred)
        [3] sum( sum_c |gt_geo - pred_geo| * gt_score )
    """
    t = pl.program_id(1)

    @pl.when(t == 0)
    def _init():
        out_ref[...] = jnp.zeros_like(out_ref)

    rows_tile = gs_ref.shape[0]
    num_chunks = rows_tile // _SUBLANES
    tile_row0 = t * rows_tile

    def chunk_body(i, carry):
        a_gs, a_ps, a_int, a_geo = carry
        r0 = pl.multiple_of(i * _SUBLANES, _SUBLANES)

        gs = gs_ref[pl.ds(r0, _SUBLANES), :].astype(jnp.float32)   # (8, 128)
        ps = ps_ref[pl.ds(r0, _SUBLANES), :].astype(jnp.float32)   # (8, 128)
        # Keep the geo diff / channel-sum in the native dtype (halves vreg
        # pressure for bf16 on v6e/v7x); upcast the (8,128) result to f32
        # before the score multiply and accumulation.
        gg = gg_ref[:, pl.ds(r0, _SUBLANES), :]                    # (C, 8, 128)
        pg = pg_ref[:, pl.ds(r0, _SUBLANES), :]
        geo = jnp.sum(jnp.abs(gg - pg), axis=0).astype(jnp.float32)

        if apply_mask:
            # Ragged tail: the last tile extends past the real row count; the
            # out-of-bounds region of the block is unspecified, so select it
            # away (select, not multiply, so garbage NaN/Inf cannot leak).
            row_ids = lax.broadcasted_iota(jnp.int32, (_SUBLANES, _LANES), 0)
            valid = (tile_row0 + r0 + row_ids) < rows_valid
            gs = jnp.where(valid, gs, 0.0)
            ps = jnp.where(valid, ps, 0.0)
            geo = jnp.where(valid, geo, 0.0)

        return (a_gs + gs, a_ps + ps, a_int + gs * ps, a_geo + geo * gs)

    zeros = jnp.zeros((_SUBLANES, _LANES), jnp.float32)
    a_gs, a_ps, a_int, a_geo = lax.fori_loop(
        0, num_chunks, chunk_body, (zeros, zeros, zeros, zeros),
        unroll=min(8, num_chunks))

    out_ref[0] += a_gs
    out_ref[1] += a_ps
    out_ref[2] += a_int
    out_ref[3] += a_geo


def east_loss(gt_score, pred_score, gt_geo, pred_geo):
    """EASTLoss.forward (use_ohem=False, use_focal_geo=False)."""
    B, _, H, W = gt_score.shape
    C = gt_geo.shape[1]
    HW = H * W

    rows_raw = pl.cdiv(HW, _LANES)

    # Tile sizing from the *actual* input dtypes (bf16 -> bigger tiles).
    bytes_per_row = (gt_score.dtype.itemsize + pred_score.dtype.itemsize
                     + C * (gt_geo.dtype.itemsize + pred_geo.dtype.itemsize)) * _LANES
    rows_budget = max(
        _SUBLANES,
        (_VMEM_INPUT_BUDGET // (2 * bytes_per_row)) // _SUBLANES * _SUBLANES)
    num_tiles = pl.cdiv(rows_raw, rows_budget)
    rows_tile = _round_up(pl.cdiv(rows_raw, num_tiles), _SUBLANES)
    needs_mask = (num_tiles * rows_tile) != rows_raw   # ragged tail -> in-kernel mask

    # Only pad when H*W is not a multiple of 128 (lane raggedness); the zero
    # padding is neutral for every partial sum. No row-level padding ever.
    hw_pad = rows_raw * _LANES
    gs = gt_score.reshape(B, HW)
    ps = pred_score.reshape(B, HW)
    gg = gt_geo.reshape(B, C, HW)
    pg = pred_geo.reshape(B, C, HW)
    if hw_pad != HW:
        pad = hw_pad - HW
        gs = jnp.pad(gs, ((0, 0), (0, pad)))
        ps = jnp.pad(ps, ((0, 0), (0, pad)))
        gg = jnp.pad(gg, ((0, 0), (0, 0), (0, pad)))
        pg = jnp.pad(pg, ((0, 0), (0, 0), (0, pad)))
    gs = gs.reshape(B, rows_raw, _LANES)
    ps = ps.reshape(B, rows_raw, _LANES)
    gg = gg.reshape(B, C, rows_raw, _LANES)
    pg = pg.reshape(B, C, rows_raw, _LANES)

    score_spec = pl.BlockSpec((None, rows_tile, _LANES), lambda b, t: (b, t, 0))
    geo_spec = pl.BlockSpec((None, C, rows_tile, _LANES), lambda b, t: (b, 0, t, 0))
    out_spec = pl.BlockSpec((None, 4, _SUBLANES, _LANES), lambda b, t: (b, 0, 0, 0))

    kernel = functools.partial(
        _east_sums_kernel, rows_valid=rows_raw, apply_mask=needs_mask)

    # Explicit VMEM limit: double-buffered input tiles + small margin for the
    # resident output block and in-kernel temporaries.
    vmem_limit = int(min(64 << 20,
                         max(16 << 20, 2 * bytes_per_row * rows_tile + (4 << 20))))

    in_bytes = gs.nbytes + ps.nbytes + gg.nbytes + pg.nbytes
    out_bytes = B * 4 * _SUBLANES * _LANES * 4

    # NOTE: with B == 1 on v7x one TensorCore idles; the kernel is HBM-bound
    # so a row-split "parallel" axis would not change wall-clock materially.
    partials = pl.pallas_call(
        kernel,
        out_shape=jax.ShapeDtypeStruct((B, 4, _SUBLANES, _LANES), jnp.float32),
        grid_spec=pltpu.PrefetchScalarGridSpec(
            num_scalar_prefetch=0,
            grid=(B, num_tiles),
            in_specs=[score_spec, score_spec, geo_spec, geo_spec],
            out_specs=out_spec,
        ),
        compiler_params=pltpu.CompilerParams(
            dimension_semantics=("parallel", "arbitrary"),
            vmem_limit_bytes=vmem_limit),
        cost_estimate=pl.CostEstimate(
            flops=int(B * HW * (3 * C + 10)),
            transcendentals=0,
            bytes_accessed=int(in_bytes + out_bytes)),
    )(gs, ps, gg, pg)

    sums = jnp.sum(partials, axis=(0, 2, 3))          # (4,) tiny collapse in XLA
    s_gt, s_pr, s_int, s_geo = sums[0], sums[1], sums[2], sums[3]

    dice = 1.0 - 2.0 * s_int / (s_gt + s_pr + 1e-5)
    geo_loss = s_geo / (s_gt + 1e-5)
    loss = dice + geo_loss

    # Early-exit branch of the PyTorch forward: return 0.0 if sum(gt) < 1.
    # TODO(synk): use_ohem per-image top-k and use_focal_geo reweighting are
    # disabled in the default config and are not implemented here.
    return jnp.where(s_gt < 1.0, jnp.float32(0.0), loss)


def _east_loss_ref(gt_score, pred_score, gt_geo, pred_geo):
    """Pure-JAX reference mirroring the PyTorch module (default flags)."""
    s_gt = jnp.sum(gt_score)
    inter = jnp.sum(gt_score * pred_score)
    union = s_gt + jnp.sum(pred_score) + 1e-5
    dice = 1.0 - 2.0 * inter / union
    geo_map = jnp.sum(jnp.abs(gt_geo - pred_geo), axis=1)
    geo_map = geo_map * gt_score[:, 0]
    geo_loss = jnp.sum(geo_map) / (s_gt + 1e-5)
    return jnp.where(s_gt < 1.0, jnp.float32(0.0), dice + geo_loss)


if __name__ == "__main__":
    B, C_GEO, H, W = 2, 5, 16, 16

    key = jax.random.PRNGKey(0)
    k1, k2, k3, k4 = jax.random.split(key, 4)

    # Binary-ish ground-truth score map, probabilities for the prediction,
    # positive geometry channels (distances/angle).
    gt_score = (jax.random.uniform(k1, (B, 1, H, W)) > 0.6).astype(jnp.float32)
    pred_score = jax.random.uniform(k2, (B, 1, H, W), dtype=jnp.float32)
    gt_geo = jax.random.uniform(k3, (B, C_GEO, H, W), dtype=jnp.float32) * 8.0
    pred_geo = jax.random.uniform(k4, (B, C_GEO, H, W), dtype=jnp.float32) * 8.0

    out = jax.block_until_ready(east_loss(gt_score, pred_score, gt_geo, pred_geo))
    ref = _east_loss_ref(gt_score, pred_score, gt_geo, pred_geo)
    assert jnp.allclose(out, ref, rtol=1e-5, atol=1e-4), (out, ref)

    # Early-exit branch: all-zero ground truth -> loss 0.0.
    zero_gt = jnp.zeros_like(gt_score)
    out0 = jax.block_until_ready(east_loss(zero_gt, pred_score, gt_geo, pred_geo))
    assert jnp.allclose(out0, 0.0), out0

    print("KERNEL_OK")
</pallas_src>

<mosaic_0001>
module attributes {stable_mosaic.version = 11 : i64} {
  func.func @_east_sums_kernel(%arg0: i32, %arg1: i32, %arg2: memref<1x8x128xf32, #tpu.memory_space<vmem>>, %arg3: memref<1x8x128xf32, #tpu.memory_space<vmem>>, %arg4: memref<1x5x8x128xf32, #tpu.memory_space<vmem>>, %arg5: memref<1x5x8x128xf32, #tpu.memory_space<vmem>>, %arg6: memref<1x4x8x128xf32, #tpu.memory_space<vmem>>) attributes {dimension_semantics = [#tpu.dimension_semantics<parallel>, #tpu.dimension_semantics<arbitrary>], iteration_bounds = array<i64: 2, 1>, scalar_prefetch = 0 : i64, scratch_operands = 0 : i64, tpu.core_type = #tpu.core_type<tc>, window_params = [{transform_indices = @transform_0, window_bounds = array<i64: 1, 8, 128>}, {transform_indices = @transform_1, window_bounds = array<i64: 1, 8, 128>}, {transform_indices = @transform_2, window_bounds = array<i64: 1, 5, 8, 128>}, {transform_indices = @transform_3, window_bounds = array<i64: 1, 5, 8, 128>}, {transform_indices = @transform_4, window_bounds = array<i64: 1, 4, 8, 128>}]} {
    %c0_i32 = arith.constant 0 : i32
    %0 = arith.cmpi eq, %arg1, %c0_i32 : i32
    %1 = arith.extui %0 : i1 to i32
    %c0_i32_0 = arith.constant 0 : i32
    %2 = arith.cmpi ne, %1, %c0_i32_0 : i32
    scf.if %2 {
      %cst_45 = arith.constant 0.000000e+00 : f32
      %64 = vector.broadcast %cst_45 : f32 to vector<4x8x128xf32>
      %c0_46 = arith.constant 0 : index
      %c0_47 = arith.constant 0 : index
      %c0_48 = arith.constant 0 : index
      %c0_49 = arith.constant 0 : index
      %65 = vector.load %arg6[%c0_46, %c0_47, %c0_48, %c0_49] : memref<1x4x8x128xf32, #tpu.memory_space<vmem>>, vector<1x4x8x128xf32>
      %66 = vector.shape_cast %65 : vector<1x4x8x128xf32> to vector<4x8x128xf32>
      %67 = vector.shape_cast %64 : vector<4x8x128xf32> to vector<1x4x8x128xf32>
      tpu.vector_store %arg6[%c0_46, %c0_47, %c0_48, %c0_49], %67 {strides = array<i32>} : memref<1x4x8x128xf32, #tpu.memory_space<vmem>>, vector<1x4x8x128xf32>,
    } else {
    }
    %c8_i32 = arith.constant 8 : i32
    %3 = arith.muli %arg1, %c8_i32 : i32
    %cst = arith.constant 0.000000e+00 : f32
    %4 = vector.broadcast %cst : f32 to vector<8x128xf32>
    %c0_i32_1 = arith.constant 0 : i32
    %c8_i32_2 = arith.constant 8 : i32
    %5 = arith.muli %c0_i32_1, %c8_i32_2 : i32
    %6 = tpu.assume_multiple %5, 8 : i32
    %c0 = arith.constant 0 : index
    %7 = arith.index_cast %6 : i32 to index
    %c0_3 = arith.constant 0 : index
    %8 = vector.load %arg2[%c0, %7, %c0_3] : memref<1x8x128xf32, #tpu.memory_space<vmem>>, vector<1x8x128xf32>
    %9 = vector.shape_cast %8 : vector<1x8x128xf32> to vector<8x128xf32>
    %c0_4 = arith.constant 0 : index
    %10 = arith.index_cast %6 : i32 to index
    %c0_5 = arith.constant 0 : index
    %11 = vector.load %arg3[%c0_4, %10, %c0_5] : memref<1x8x128xf32, #tpu.memory_space<vmem>>, vector<1x8x128xf32>
    %12 = vector.shape_cast %11 : vector<1x8x128xf32> to vector<8x128xf32>
    %c0_6 = arith.constant 0 : index
    %c0_7 = arith.constant 0 : index
    %13 = arith.index_cast %6 : i32 to index
    %c0_8 = arith.constant 0 : index
    %14 = vector.load %arg4[%c0_6, %c0_7, %13, %c0_8] : memref<1x5x8x128xf32, #tpu.memory_space<vmem>>, vector<1x5x8x128xf32>
    %15 = vector.shape_cast %14 : vector<1x5x8x128xf32> to vector<5x8x128xf32>
    %c0_9 = arith.constant 0 : index
    %c0_10 = arith.constant 0 : index
    %16 = arith.index_cast %6 : i32 to index
    %c0_11 = arith.constant 0 : index
    %17 = vector.load %arg5[%c0_9, %c0_10, %16, %c0_11] : memref<1x5x8x128xf32, #tpu.memory_space<vmem>>, vector<1x5x8x128xf32>
    %18 = vector.shape_cast %17 : vector<1x5x8x128xf32> to vector<5x8x128xf32>
    %19 = arith.subf %15, %18 : vector<5x8x128xf32>
    %20 = math.absf %19 : vector<5x8x128xf32>
    %cst_12 = arith.constant dense<0.000000e+00> : vector<8x128xf32>
    %21 = vector.multi_reduction <add>, %20, %cst_12 [0] : vector<5x8x128xf32> to vector<8x128xf32>
    %22 = tpu.iota {dimensions = array<i32: 0>} : vector<8x128xi32>
    %23 = arith.addi %3, %6 : i32
    %24 = vector.broadcast %23 : i32 to vector<8x128xi32>
    %25 = arith.addi %24, %22 : vector<8x128xi32>
    %c2_i32 = arith.constant 2 : i32
    %26 = vector.broadcast %c2_i32 : i32 to vector<8x128xi32>
    %27 = arith.cmpi slt, %25, %26 : vector<8x128xi32>
    %cst_13 = arith.constant 0.000000e+00 : f32
    %28 = vector.broadcast %cst_13 : f32 to vector<8x128xf32>
    %29 = arith.select %27, %9, %28 : vector<8x128xi1>, vector<8x128xf32>
    %cst_14 = arith.constant 0.000000e+00 : f32
    %30 = vector.broadcast %cst_14 : f32 to vector<8x128xf32>
    %31 = arith.select %27, %12, %30 : vector<8x128xi1>, vector<8x128xf32>
    %cst_15 = arith.constant 0.000000e+00 : f32
    %32 = vector.broadcast %cst_15 : f32 to vector<8x128xf32>
    %33 = arith.select %27, %21, %32 : vector<8x128xi1>, vector<8x128xf32>
    %34 = arith.addf %4, %29 : vector<8x128xf32>
    %35 = arith.addf %4, %31 : vector<8x128xf32>
    %36 = arith.mulf %29, %31 : vector<8x128xf32>
    %37 = arith.addf %4, %36 : vector<8x128xf32>
    %38 = arith.mulf %33, %29 : vector<8x128xf32>
    %39 = arith.addf %4, %38 : vector<8x128xf32>
    %c1_i32 = arith.constant 1 : i32
    %c0_16 = arith.constant 0 : index
    %c0_17 = arith.constant 0 : index
    %c0_18 = arith.constant 0 : index
    %c0_19 = arith.constant 0 : index
    %40 = vector.load %arg6[%c0_16, %c0_17, %c0_18, %c0_19] : memref<1x4x8x128xf32, #tpu.memory_space<vmem>>, vector<1x1x8x128xf32>
    %41 = vector.shape_cast %40 : vector<1x1x8x128xf32> to vector<8x128xf32>
    %42 = arith.addf %41, %34 : vector<8x128xf32>
    %c0_20 = arith.constant 0 : index
    %c0_21 = arith.constant 0 : index
    %c0_22 = arith.constant 0 : index
    %c0_23 = arith.constant 0 : index
    %43 = vector.load %arg6[%c0_20, %c0_21, %c0_22, %c0_23] : memref<1x4x8x128xf32, #tpu.memory_space<vmem>>, vector<1x1x8x128xf32>
    %44 = vector.shape_cast %43 : vector<1x1x8x128xf32> to vector<8x128xf32>
    %45 = vector.shape_cast %42 : vector<8x128xf32> to vector<1x1x8x128xf32>
    tpu.vector_store %arg6[%c0_20, %c0_21, %c0_22, %c0_23], %45 {strides = array<i32>} : memref<1x4x8x128xf32, #tpu.memory_space<vmem>>, vector<1x1x8x128xf32>,
    %c0_24 = arith.constant 0 : index
    %c1 = arith.constant 1 : index
    %c0_25 = arith.constant 0 : index
    %c0_26 = arith.constant 0 : index
    %46 = vector.load %arg6[%c0_24, %c1, %c0_25, %c0_26] : memref<1x4x8x128xf32, #tpu.memory_space<vmem>>, vector<1x1x8x128xf32>
    %47 = vector.shape_cast %46 : vector<1x1x8x128xf32> to vector<8x128xf32>
    %48 = arith.addf %47, %35 : vector<8x128xf32>
    %c0_27 = arith.constant 0 : index
    %c1_28 = arith.constant 1 : index
    %c0_29 = arith.constant 0 : index
    %c0_30 = arith.constant 0 : index
    %49 = vector.load %arg6[%c0_27, %c1_28, %c0_29, %c0_30] : memref<1x4x8x128xf32, #tpu.memory_space<vmem>>, vector<1x1x8x128xf32>
    %50 = vector.shape_cast %49 : vector<1x1x8x128xf32> to vector<8x128xf32>
    %51 = vector.shape_cast %48 : vector<8x128xf32> to vector<1x1x8x128xf32>
    tpu.vector_store %arg6[%c0_27, %c1_28, %c0_29, %c0_30], %51 {strides = array<i32>} : memref<1x4x8x128xf32, #tpu.memory_space<vmem>>, vector<1x1x8x128xf32>,
    %c0_31 = arith.constant 0 : index
    %c2 = arith.constant 2 : index
    %c0_32 = arith.constant 0 : index
    %c0_33 = arith.constant 0 : index
    %52 = vector.load %arg6[%c0_31, %c2, %c0_32, %c0_33] : memref<1x4x8x128xf32, #tpu.memory_space<vmem>>, vector<1x1x8x128xf32>
    %53 = vector.shape_cast %52 : vector<1x1x8x128xf32> to vector<8x128xf32>
    %54 = arith.addf %53, %37 : vector<8x128xf32>
    %c0_34 = arith.constant 0 : index
    %c2_35 = arith.constant 2 : index
    %c0_36 = arith.constant 0 : index
    %c0_37 = arith.constant 0 : index
    %55 = vector.load %arg6[%c0_34, %c2_35, %c0_36, %c0_37] : memref<1x4x8x128xf32, #tpu.memory_space<vmem>>, vector<1x1x8x128xf32>
    %56 = vector.shape_cast %55 : vector<1x1x8x128xf32> to vector<8x128xf32>
    %57 = vector.shape_cast %54 : vector<8x128xf32> to vector<1x1x8x128xf32>
    tpu.vector_store %arg6[%c0_34, %c2_35, %c0_36, %c0_37], %57 {strides = array<i32>} : memref<1x4x8x128xf32, #tpu.memory_space<vmem>>, vector<1x1x8x128xf32>,
    %c0_38 = arith.constant 0 : index
    %c3 = arith.constant 3 : index
    %c0_39 = arith.constant 0 : index
    %c0_40 = arith.constant 0 : index
    %58 = vector.load %arg6[%c0_38, %c3, %c0_39, %c0_40] : memref<1x4x8x128xf32, #tpu.memory_space<vmem>>, vector<1x1x8x128xf32>
    %59 = vector.shape_cast %58 : vector<1x1x8x128xf32> to vector<8x128xf32>
    %60 = arith.addf %59, %39 : vector<8x128xf32>
    %c0_41 = arith.constant 0 : index
    %c3_42 = arith.constant 3 : index
    %c0_43 = arith.constant 0 : index
    %c0_44 = arith.constant 0 : index
    %61 = vector.load %arg6[%c0_41, %c3_42, %c0_43, %c0_44] : memref<1x4x8x128xf32, #tpu.memory_space<vmem>>, vector<1x1x8x128xf32>
    %62 = vector.shape_cast %61 : vector<1x1x8x128xf32> to vector<8x128xf32>
    %63 = vector.shape_cast %60 : vector<8x128xf32> to vector<1x1x8x128xf32>
    tpu.vector_store %arg6[%c0_41, %c3_42, %c0_43, %c0_44], %63 {strides = array<i32>} : memref<1x4x8x128xf32, #tpu.memory_space<vmem>>, vector<1x1x8x128xf32>,
    return
  }
  func.func @transform_0(%arg0: i32, %arg1: i32) -> (i32, i32, i32) {
    %c0_i32 = arith.constant 0 : i32
    %c0_i32_0 = arith.constant 0 : i32
    return %arg0, %arg1, %c0_i32 : i32, i32, i32
  }
  func.func @transform_1(%arg0: i32, %arg1: i32) -> (i32, i32, i32) {
    %c0_i32 = arith.constant 0 : i32
    %c0_i32_0 = arith.constant 0 : i32
    return %arg0, %arg1, %c0_i32 : i32, i32, i32
  }
  func.func @transform_2(%arg0: i32, %arg1: i32) -> (i32, i32, i32, i32) {
    %c0_i32 = arith.constant 0 : i32
    %c0_i32_0 = arith.constant 0 : i32
    %c0_i32_1 = arith.constant 0 : i32
    return %arg0, %c0_i32, %arg1, %c0_i32_0 : i32, i32, i32, i32
  }
  func.func @transform_3(%arg0: i32, %arg1: i32) -> (i32, i32, i32, i32) {
    %c0_i32 = arith.constant 0 : i32
    %c0_i32_0 = arith.constant 0 : i32
    %c0_i32_1 = arith.constant 0 : i32
    return %arg0, %c0_i32, %arg1, %c0_i32_0 : i32, i32, i32, i32
  }
  func.func @transform_4(%arg0: i32, %arg1: i32) -> (i32, i32, i32, i32) {
    %c0_i32 = arith.constant 0 : i32
    %c0_i32_0 = arith.constant 0 : i32
    %c0_i32_1 = arith.constant 0 : i32
    %c0_i32_2 = arith.constant 0 : i32
    return %arg0, %c0_i32, %c0_i32_0, %c0_i32_1 : i32, i32, i32, i32
  }
}

</mosaic_0001>

<llo_original>
// kernel: tpu_custom_call.1
$region0: #{tpu_custom_call.1}
  #allocation0 [shape = 'u32[]', space=smem, size = 0x4, offset = 0x4, fixed_abs, tag = 'smem constant byte address 0x4 - core index']
  #allocation1 [shape = 'u32[72,128]{1,0:T(1,128)}', space=vmem, size = 0x9000, scoped, tag = 'internal scratch']
  #allocation11 [shape = 's32[]', space=sflag, size = 0x4, offset = 0, fixed_abs, tag = 'sflag constant byte address 0x0 - dummy sync flag']
  #allocation13 [shape = 's32[]', space=sflag, size = 0x4, offset = 0, fixed_abs, tag = 'sflag constant byte address 0x0 - dummy sync flag']
  %s0 = inlined_call_operand.hbm [shape: f32[2,2,128], index: 0, kind: input, shape index: {}]
  %s1 = inlined_call_operand.hbm [shape: f32[2,2,128], index: 1, kind: input, shape index: {}]
  %s2 = inlined_call_operand.hbm [shape: f32[2,5,2,128], index: 2, kind: input, shape index: {}]
  %s3 = inlined_call_operand.hbm [shape: f32[2,5,2,128], index: 3, kind: input, shape index: {}]
  %s4 = inlined_call_operand.hbm [shape: f32[2,4,8,128], index: 4, kind: output, shape index: {}]
  %s5 = sld [smem:[#allocation0]]
  $region69: #{tpu_custom_call.1} parent=0
    _
  %s7 = ssub.s32 1, %s5
  %s8 = scalar_select 0, %s7, %s5
  $region1: #{tpu_custom_call.1} parent=0
    #allocation2 [shape = 'u8[8192]{0}', space=vmem, size = 0x2000, scoped, tag = 'input window, operand 0']
    #allocation3 [shape = 's32[2]{0}', space=sflag, size = 0x8, scoped, tag = 'scoped memory for tpu_custom_call.1']
    #allocation4 [shape = 's32[2]{0}', space=sflag, size = 0x8, scoped, tag = 'scoped memory for tpu_custom_call.1']
    #allocation5 [shape = 'u8[8192]{0}', space=vmem, size = 0x2000, scoped, tag = 'input window, operand 1']
    #allocation6 [shape = 's32[2]{0}', space=sflag, size = 0x8, scoped, tag = 'scoped memory for tpu_custom_call.1']
    #allocation7 [shape = 'u8[40960]{0}', space=vmem, size = 0xa000, scoped, tag = 'input window, operand 2']
    #allocation8 [shape = 'u8[40960]{0}', space=vmem, size = 0xa000, scoped, tag = 'input window, operand 3']
    #allocation9 [shape = 's32[2]{0}', space=sflag, size = 0x8, scoped, tag = 'scoped memory for tpu_custom_call.1']
    #allocation10 [shape = 'u8[32768]{0}', space=vmem, size = 0x8000, scoped, tag = 'output window, operand 0']
    %9 = vsyncpa [#allocation3], 0
    %s10 = scalar_lea.sflag [#allocation3], 1
    %11 = vsyncpa %s10, 0
    %12 = vsyncpa [#allocation6], 0
    %s13 = scalar_lea.sflag [#allocation6], 1
    %14 = vsyncpa %s13, 0
    %15 = vsyncpa [#allocation9], 0
    %s16 = scalar_lea.sflag [#allocation9], 1
    %17 = vsyncpa %s16, 0
    %18 = vsyncpa [#allocation4], 0
    %s19 = scalar_lea.sflag [#allocation4], 1
    %20 = vsyncpa %s19, 0
    loop: start=0, step=1, limit=4
    $region2: #{tpu_custom_call.1} parent=1 // loop_pre_header
      _
    $region3: #{tpu_custom_call.1} parent=1 // loop_header
      %s22 = sphi 0, %s26
      %p23 = scmp.ge.s32.totalorder %s22, 4
      %s29 = sphi 0, %s41
      %s30 = sphi 0, %s37
      %s31 = sphi 0, %s29
      %s32 = sphi 0, %s30
      %s33 = sphi 0, %s31
      %s34 = sphi 0, %s32
      %s46 = sphi 0, %s48
      %s49 = sphi 0, %s46
      %s50 = sphi 0, %s49
      %s66 = sphi 0, %s50
      %s74 = sphi 0, %s76
      %s77 = sphi 0, %s74
      %s78 = sphi 0, %s77
      %s94 = sphi 0, %s78
      %s102 = sphi 0, %s104
      %s105 = sphi 0, %s102
      %s106 = sphi 0, %s105
      %s122 = sphi 0, %s106
      %s130 = sphi 0, %s132
      %s133 = sphi 0, %s130
      %s134 = sphi 0, %s133
      %s150 = sphi 0, %s134
      %s156 = sphi 0, %s158
      %s159 = sphi 0, %s156
      %s160 = sphi 0, %s159
      %s176 = sphi 0, %s160
    $region4: #{tpu_custom_call.1} parent=1 // loop_header_branch
      %25 = sbr.rel (%p23) target = $region8
    $region5: #{tpu_custom_call.1} parent=1 // loop_body
      %s27 = ssub.s32 %s22, 1
      %s28 = ssub.s32 %s22, 2
      %s35 = sadd.s32 1, %s30
      %p36 = scmp.ge.s32.totalorder %s35, 1
      %s37 = scalar_select %p36, 0, %s35
      %s38 = sadd.s32 1, %s29
      %s39 = scalar_select %p36, %s38, %s29
      %p40 = scmp.ge.s32.totalorder %s39, 2
      %s41 = scalar_select %p40, 0, %s39
      %s42 = ssub.s32 %s29, %s41
      %s43 = ssub.s32 %s30, %s37
      %s44 = sor.u32 %s42, %s43
      %p45 = scmp.eq.s32.totalorder %s44, 0
      %s47 = sadd.s32 %s46, 1
      %s48 = scalar_select %p45, %s46, %s47
      %p51 = pneg %p45
      %p52 = scmp.eq.s32.totalorder %s22, 1
      %p53 = por %p51, %p52
      %p54 = scmp.ne.s32.totalorder %s46, %s49
      %p55 = scmp.eq.s32.totalorder %s22, 0
      %p56 = por %p54, %p55
      %p57 = scmp.ne.s32.totalorder %s46, %s49
      %p58 = scmp.eq.s32.totalorder %s27, 1
      %p59 = por %p57, %p58
      %p60 = scmp.ne.s32.totalorder %s49, %s50
      %p61 = scmp.eq.s32.totalorder %s27, 0
      %p62 = por %p60, %p61
      %p63 = scmp.ne.s32.totalorder %s49, %s50
      %p64 = scmp.eq.s32.totalorder %s28, 1
      %p65 = por %p63, %p64
      %p67 = scmp.ne.s32.totalorder %s50, %s66
      %p68 = scmp.eq.s32.totalorder %s28, 0
      %p69 = por %p67, %p68
      %s70 = ssub.s32 %s29, %s41
      %s71 = ssub.s32 %s30, %s37
      %s72 = sor.u32 %s70, %s71
      %p73 = scmp.eq.s32.totalorder %s72, 0
      %s75 = sadd.s32 %s74, 1
      %s76 = scalar_select %p73, %s74, %s75
      %p79 = pneg %p73
      %p80 = scmp.eq.s32.totalorder %s22, 1
      %p81 = por %p79, %p80
      %p82 = scmp.ne.s32.totalorder %s74, %s77
      %p83 = scmp.eq.s32.totalorder %s22, 0
      %p84 = por %p82, %p83
      %p85 = scmp.ne.s32.totalorder %s74, %s77
      %p86 = scmp.eq.s32.totalorder %s27, 1
      %p87 = por %p85, %p86
      %p88 = scmp.ne.s32.totalorder %s77, %s78
      %p89 = scmp.eq.s32.totalorder %s27, 0
      %p90 = por %p88, %p89
      %p91 = scmp.ne.s32.totalorder %s77, %s78
      %p92 = scmp.eq.s32.totalorder %s28, 1
      %p93 = por %p91, %p92
      %p95 = scmp.ne.s32.totalorder %s78, %s94
      %p96 = scmp.eq.s32.totalorder %s28, 0
      %p97 = por %p95, %p96
      %s98 = ssub.s32 %s29, %s41
      %s99 = ssub.s32 %s30, %s37
      %s100 = sor.u32 %s98, %s99
      %p101 = scmp.eq.s32.totalorder %s100, 0
      %s103 = sadd.s32 %s102, 1
      %s104 = scalar_select %p101, %s102, %s103
      %p107 = pneg %p101
      %p108 = scmp.eq.s32.totalorder %s22, 1
      %p109 = por %p107, %p108
      %p110 = scmp.ne.s32.totalorder %s102, %s105
      %p111 = scmp.eq.s32.totalorder %s22, 0
      %p112 = por %p110, %p111
      %p113 = scmp.ne.s32.totalorder %s102, %s105
      %p114 = scmp.eq.s32.totalorder %s27, 1
      %p115 = por %p113, %p114
      %p116 = scmp.ne.s32.totalorder %s105, %s106
      %p117 = scmp.eq.s32.totalorder %s27, 0
      %p118 = por %p116, %p117
      %p119 = scmp.ne.s32.totalorder %s105, %s106
      %p120 = scmp.eq.s32.totalorder %s28, 1
      %p121 = por %p119, %p120
      %p123 = scmp.ne.s32.totalorder %s106, %s122
      %p124 = scmp.eq.s32.totalorder %s28, 0
      %p125 = por %p123, %p124
      %s126 = ssub.s32 %s29, %s41
      %s127 = ssub.s32 %s30, %s37
      %s128 = sor.u32 %s126, %s127
      %p129 = scmp.eq.s32.totalorder %s128, 0
      %s131 = sadd.s32 %s130, 1
      %s132 = scalar_select %p129, %s130, %s131
      %p135 = pneg %p129
      %p136 = scmp.eq.s32.totalorder %s22, 1
      %p137 = por %p135, %p136
      %p138 = scmp.ne.s32.totalorder %s130, %s133
      %p139 = scmp.eq.s32.totalorder %s22, 0
      %p140 = por %p138, %p139
      %p141 = scmp.ne.s32.totalorder %s130, %s133
      %p142 = scmp.eq.s32.totalorder %s27, 1
      %p143 = por %p141, %p142
      %p144 = scmp.ne.s32.totalorder %s133, %s134
      %p145 = scmp.eq.s32.totalorder %s27, 0
      %p146 = por %p144, %p145
      %p147 = scmp.ne.s32.totalorder %s133, %s134
      %p148 = scmp.eq.s32.totalorder %s28, 1
      %p149 = por %p147, %p148
      %p151 = scmp.ne.s32.totalorder %s134, %s150
      %p152 = scmp.eq.s32.totalorder %s28, 0
      %p153 = por %p151, %p152
      %s154 = ssub.s32 %s29, %s41
      %p155 = scmp.eq.s32.totalorder %s154, 0
      %s157 = sadd.s32 %s156, 1
      %s158 = scalar_select %p155, %s156, %s157
      %p161 = pneg %p155
      %p162 = scmp.eq.s32.totalorder %s22, 1
      %p163 = por %p161, %p162
      %p164 = scmp.ne.s32.totalorder %s156, %s159
      %p165 = scmp.eq.s32.totalorder %s22, 0
      %p166 = por %p164, %p165
      %p167 = scmp.ne.s32.totalorder %s156, %s159
      %p168 = scmp.eq.s32.totalorder %s27, 1
      %p169 = por %p167, %p168
      %p170 = scmp.ne.s32.totalorder %s159, %s160
      %p171 = scmp.eq.s32.totalorder %s27, 0
      %p172 = por %p170, %p171
      %p173 = scmp.ne.s32.totalorder %s159, %s160
      %p174 = scmp.eq.s32.totalorder %s28, 1
      %p175 = por %p173, %p174
      %p177 = scmp.ne.s32.totalorder %s160, %s176
      %p178 = scmp.eq.s32.totalorder %s28, 0
      %p179 = por %p177, %p178
      %p180 = scmp.le.s32.totalorder 1, %s22
      %p181 = scmp.lt.s32.totalorder %s22, 3
      %p182 = pnand %p180, %p181
      %p183 = pneg %p182
      // Predicated region
      $region9: #{tpu_custom_call.1} parent=5 // pred_check
        _
      $region10: #{tpu_custom_call.1} parent=5 // pred_check_branch
        %185 = sbr.rel (%p182) target = $region12
      $region11: #{tpu_custom_call.1} parent=5 // pred_region
        %s186 = ssub.s32 %s22, 1
      $region12: #{tpu_custom_call.1} parent=5 // pred_fallthru
        _
      %p187 = scmp.lt.s32.totalorder %s22, 2
      // Predicated region
      $region13: #{tpu_custom_call.1} parent=5 // pred_check
        %p188 = pneg %p187
      $region14: #{tpu_custom_call.1} parent=5 // pred_check_branch
        %190 = sbr.rel (%p188) target = $region16
      $region15: #{tpu_custom_call.1} parent=5 // pred_region
        // Predicated region
        $region17: #{tpu_custom_call.1} parent=15 // pred_check
          %p191 = pneg %p56
        $region18: #{tpu_custom_call.1} parent=15 // pred_check_branch
          %193 = sbr.rel (%p191) target = $region20
        $region19: #{tpu_custom_call.1} parent=15 // pred_region
          %s194 = sand.u32 %s46, 1
          %s195 = scalar_lea.sflag [#allocation3], %s194
          %s196 = sand.u32 %s46, 1
          %s197 = smul.addr %s196, 8
          %s198 = scalar_lea.vmem [#allocation2], %s197
          %s199 = smul.u32 4, %s30
          %s200 = ssub.s32 1, %s199
          %s201 = smul.u32 2, %s200
          %s202 = ssub.s32 8, %s201
          %s203 = sshll.u32 %s202, 4
          %204 = vsyncadd %s195, %s203
          %p205 = scmp.ne.s32.totalorder 0, %s201
          %s206 = sadd.s32 %s199, %s29
          %s207 = smul.addr %s206, 2
          %s208 = scalar_lea.hbm %s0, %s207
          %s209 = smul.u32 2, %s200
          %s210 = sshll.u32 %s208, 4
          %s211 = int_to_ptr.hbm [resolvable:$true] %s210
          %s212 = sshll.u32 %s198, 4
          %s213 = int_to_ptr.vmem [resolvable:$true] %s212
          %s214 = sshll.u32 %s209, 4
          %218 = dma.hbm_to_vmem [thread:$0]  (%p205), %s211, %s214, %s213, %s195, 32, 32, 2
        $region20: #{tpu_custom_call.1} parent=15 // pred_fallthru
          _
        // Predicated region
        $region21: #{tpu_custom_call.1} parent=15 // pred_check
          %p219 = pneg %p84
        $region22: #{tpu_custom_call.1} parent=15 // pred_check_branch
          %221 = sbr.rel (%p219) target = $region24
        $region23: #{tpu_custom_call.1} parent=15 // pred_region
          %s222 = sand.u32 %s22, 1
          %s223 = scalar_lea.sflag [#allocation6], %s222
          %s224 = sand.u32 %s74, 1
          %s225 = smul.addr %s224, 8
          %s226 = scalar_lea.vmem [#allocation5], %s225
          %s227 = smul.u32 4, %s30
          %s228 = ssub.s32 1, %s227
          %s229 = smul.u32 2, %s228
          %s230 = ssub.s32 8, %s229
          %s231 = sshll.u32 %s230, 4
          %232 = vsyncadd %s223, %s231
          %p233 = scmp.ne.s32.totalorder 0, %s229
          %s234 = sadd.s32 %s227, %s29
          %s235 = smul.addr %s234, 2
          %s236 = scalar_lea.hbm %s1, %s235
          %s237 = smul.u32 2, %s228
          %s238 = sshll.u32 %s236, 4
          %s239 = int_to_ptr.hbm [resolvable:$true] %s238
          %s240 = sshll.u32 %s226, 4
          %s241 = int_to_ptr.vmem [resolvable:$true] %s240
          %s242 = sshll.u32 %s237, 4
          %246 = dma.hbm_to_vmem [thread:$0]  (%p233), %s239, %s242, %s241, %s223, 32, 32, 2
        $region24: #{tpu_custom_call.1} parent=15 // pred_fallthru
          _
        // Predicated region
        $region25: #{tpu_custom_call.1} parent=15 // pred_check
          %p247 = pneg %p112
        $region26: #{tpu_custom_call.1} parent=15 // pred_check_branch
          %249 = sbr.rel (%p247) target = $region28
        $region27: #{tpu_custom_call.1} parent=15 // pred_region
          #allocation12 [shape = 'u32[6]{0}', space=smem, size = 0x18, scoped, tag = 'DMA stride descriptor']
          %s250 = sand.u32 %s22, 1
          %s251 = scalar_lea.sflag [#allocation6], %s250
          %s252 = sand.u32 %s102, 1
          %s253 = smul.addr %s252, 40
          %s254 = scalar_lea.vmem [#allocation7], %s253
          %s255 = smul.u32 4, %s30
          %s256 = ssub.s32 1, %s255
          %s257 = smul.u32 10, %s256
          %s258 = ssub.s32 40, %s257
          %s259 = sshll.u32 %s258, 4
          %260 = vsyncadd %s251, %s259
          %p261 = scmp.ne.s32.totalorder 0, %s257
          %s262 = smul.addr %s29, 5
          %s263 = sadd.s32 %s255, %s262
          %s264 = smul.addr %s263, 2
          %s265 = scalar_lea.hbm %s2, %s264
          %s266 = smul.u32 2, %s256
          %s267 = smul.u32 %s266, 5
          %s269 = sshll.u32 1, 14
          %s270 = sxor.u32 4294967295, %s269
          %s272 = sld [smem:[#allocation0]]
          %s273 = sadd.s32 2, %s272
          %s275 = sshll.u32 7, 26
          %s276 = sxor.u32 4294967295, %s275
          %s277 = sand.u32 0, %s276
          %s278 = sshll.u32 %s273, 26
          %s279 = sor.u32 %s277, %s278
          %s280 = sshll.u32 %s265, 4
          %s281 = int_to_ptr.hbm [resolvable:$true] %s280
          %s282 = sshll.u32 %s254, 4
          %s283 = int_to_ptr.vmem [resolvable:$true] %s282
          %s284 = sshll.u32 %s267, 4
          %289 = sst [smem:[#allocation12]] 32
          %s290 = scalar_lea.smem [#allocation12], 1
          %291 = sst [smem:[%s290]] 128
          %s292 = scalar_lea.smem [#allocation12], 2
          %293 = sst [smem:[%s292]] %s256
          %s294 = scalar_lea.smem [#allocation12], 3
          %295 = sst [smem:[%s294]] 32
          %s296 = scalar_lea.smem [#allocation12], 4
          %297 = sst [smem:[%s296]] 32
          %s298 = scalar_lea.smem [#allocation12], 5
          %299 = sst [smem:[%s298]] 2
          %301 = dma.general (%p261), %s281, %s284, %s283, %s251, [#allocation11], [#allocation12], %s279, 0
        $region28: #{tpu_custom_call.1} parent=15 // pred_fallthru
          _
        // Predicated region
        $region29: #{tpu_custom_call.1} parent=15 // pred_check
          %p302 = pneg %p140
        $region30: #{tpu_custom_call.1} parent=15 // pred_check_branch
          %304 = sbr.rel (%p302) target = $region32
        $region31: #{tpu_custom_call.1} parent=15 // pred_region
          #allocation14 [shape = 'u32[6]{0}', space=smem, size = 0x18, scoped, tag = 'DMA stride descriptor']
          %s305 = sand.u32 %s130, 1
          %s306 = scalar_lea.sflag [#allocation9], %s305
          %s307 = sand.u32 %s130, 1
          %s308 = smul.addr %s307, 40
          %s309 = scalar_lea.vmem [#allocation8], %s308
          %s310 = smul.u32 4, %s30
          %s311 = ssub.s32 1, %s310
          %s312 = smul.u32 10, %s311
          %s313 = ssub.s32 40, %s312
          %s314 = sshll.u32 %s313, 4
          %315 = vsyncadd %s306, %s314
          %p316 = scmp.ne.s32.totalorder 0, %s312
          %s317 = smul.addr %s29, 5
          %s318 = sadd.s32 %s310, %s317
          %s319 = smul.addr %s318, 2
          %s320 = scalar_lea.hbm %s3, %s319
          %s321 = smul.u32 2, %s311
          %s322 = smul.u32 %s321, 5
          %s324 = sshll.u32 1, 14
          %s325 = sxor.u32 4294967295, %s324
          %s327 = sld [smem:[#allocation0]]
          %s328 = sadd.s32 2, %s327
          %s330 = sshll.u32 7, 26
          %s331 = sxor.u32 4294967295, %s330
          %s332 = sand.u32 0, %s331
          %s333 = sshll.u32 %s328, 26
          %s334 = sor.u32 %s332, %s333
          %s335 = sshll.u32 %s320, 4
          %s336 = int_to_ptr.hbm [resolvable:$true] %s335
          %s337 = sshll.u32 %s309, 4
          %s338 = int_to_ptr.vmem [resolvable:$true] %s337
          %s339 = sshll.u32 %s322, 4
          %344 = sst [smem:[#allocation14]] 32
          %s345 = scalar_lea.smem [#allocation14], 1
          %346 = sst [smem:[%s345]] 128
          %s347 = scalar_lea.smem [#allocation14], 2
          %348 = sst [smem:[%s347]] %s311
          %s349 = scalar_lea.smem [#allocation14], 3
          %350 = sst [smem:[%s349]] 32
          %s351 = scalar_lea.smem [#allocation14], 4
          %352 = sst [smem:[%s351]] 32
          %s353 = scalar_lea.smem [#allocation14], 5
          %354 = sst [smem:[%s353]] 2
          %356 = dma.general (%p316), %s336, %s339, %s338, %s306, [#allocation13], [#allocation14], %s334, 0
        $region32: #{tpu_custom_call.1} parent=15 // pred_fallthru
          _
      $region16: #{tpu_custom_call.1} parent=5 // pred_fallthru
        _
      %p357 = scmp.le.s32.totalorder 1, %s22
      %p358 = scmp.lt.s32.totalorder %s22, 3
      %p359 = pnand %p357, %p358
      %p360 = pneg %p359
      // Predicated region
      $region33: #{tpu_custom_call.1} parent=5 // pred_check
        _
      $region34: #{tpu_custom_call.1} parent=5 // pred_check_branch
        %362 = sbr.rel (%p359) target = $region36
      $region35: #{tpu_custom_call.1} parent=5 // pred_region
        %s363 = ssub.s32 %s22, 1
        %s364 = sand.u32 %s49, 1
        %s365 = scalar_lea.sflag [#allocation3], %s364
        %s366 = sand.u32 %s49, 1
        %s367 = smul.addr %s366, 8
        %s368 = scalar_lea.vmem [#allocation2], %s367
        // Predicated region
        $region37: #{tpu_custom_call.1} parent=35 // pred_check
          %p369 = pneg %p62
        $region38: #{tpu_custom_call.1} parent=35 // pred_check_branch
          %371 = sbr.rel (%p369) target = $region40
        $region39: #{tpu_custom_call.1} parent=35 // pred_region
          %373 = dma.done %s365, 128
        $region40: #{tpu_custom_call.1} parent=35 // pred_fallthru
          _
        %s374 = sand.u32 %s27, 1
        %s375 = scalar_lea.sflag [#allocation6], %s374
        %s376 = sand.u32 %s77, 1
        %s377 = smul.addr %s376, 8
        %s378 = scalar_lea.vmem [#allocation5], %s377
        // Predicated region
        $region41: #{tpu_custom_call.1} parent=35 // pred_check
          %p379 = pneg %p90
        $region42: #{tpu_custom_call.1} parent=35 // pred_check_branch
          %381 = sbr.rel (%p379) target = $region44
        $region43: #{tpu_custom_call.1} parent=35 // pred_region
          %383 = dma.done %s375, 128
        $region44: #{tpu_custom_call.1} parent=35 // pred_fallthru
          _
        %s384 = sand.u32 %s27, 1
        %s385 = scalar_lea.sflag [#allocation6], %s384
        %s386 = sand.u32 %s105, 1
        %s387 = smul.addr %s386, 40
        %s388 = scalar_lea.vmem [#allocation7], %s387
        // Predicated region
        $region45: #{tpu_custom_call.1} parent=35 // pred_check
          %p389 = pneg %p118
        $region46: #{tpu_custom_call.1} parent=35 // pred_check_branch
          %391 = sbr.rel (%p389) target = $region48
        $region47: #{tpu_custom_call.1} parent=35 // pred_region
          %393 = dma.done %s385, 640
        $region48: #{tpu_custom_call.1} parent=35 // pred_fallthru
          _
        %s394 = sand.u32 %s133, 1
        %s395 = scalar_lea.sflag [#allocation9], %s394
        %s396 = sand.u32 %s133, 1
        %s397 = smul.addr %s396, 40
        %s398 = scalar_lea.vmem [#allocation8], %s397
        // Predicated region
        $region49: #{tpu_custom_call.1} parent=35 // pred_check
          %p399 = pneg %p146
        $region50: #{tpu_custom_call.1} parent=35 // pred_check_branch
          %401 = sbr.rel (%p399) target = $region52
        $region51: #{tpu_custom_call.1} parent=35 // pred_region
          %403 = dma.done %s395, 640
        $region52: #{tpu_custom_call.1} parent=35 // pred_fallthru
          _
        %s404 = sand.u32 %s49, 1
        %s405 = scalar_lea.sflag [#allocation3], %s404
        %s406 = sand.u32 %s49, 1
        %s407 = smul.addr %s406, 8
        %s408 = scalar_lea.vmem [#allocation2], %s407
        %p409 = pneg %p62
        %p410 = pneg %p59
        %s411 = sand.u32 %s27, 1
        %s412 = scalar_lea.sflag [#allocation6], %s411
        %s413 = sand.u32 %s77, 1
        %s414 = smul.addr %s413, 8
        %s415 = scalar_lea.vmem [#allocation5], %s414
        %p416 = pneg %p90
        %p417 = pneg %p87
        %s418 = sand.u32 %s27, 1
        %s419 = scalar_lea.sflag [#allocation6], %s418
        %s420 = sand.u32 %s105, 1
        %s421 = smul.addr %s420, 40
        %s422 = scalar_lea.vmem [#allocation7], %s421
        %p423 = pneg %p118
        %p424 = pneg %p115
        %s425 = sand.u32 %s133, 1
        %s426 = scalar_lea.sflag [#allocation9], %s425
        %s427 = sand.u32 %s133, 1
        %s428 = smul.addr %s427, 40
        %s429 = scalar_lea.vmem [#allocation8], %s428
        %p430 = pneg %p146
        %p431 = pneg %p143
        %p432 = pneg %p172
        %p433 = pneg %p169
        %s434 = sand.u32 %s159, 1
        %s435 = scalar_lea.sflag [#allocation4], %s434
        %s436 = sand.u32 %s159, 1
        %s437 = smul.addr %s436, 32
        %s438 = scalar_lea.vmem [#allocation10], %s437
        %s439 = smul.u32 4, %s32
        %s440 = ssub.s32 1, %s439
        %s441 = smul.u32 2, %s440
        %s442 = smul.u32 4, %s32
        %s443 = ssub.s32 1, %s442
        %s444 = smul.u32 2, %s443
        %s445 = smul.u32 4, %s32
        %s446 = ssub.s32 1, %s445
        %s447 = smul.u32 10, %s446
        %s448 = smul.u32 4, %s32
        %s449 = ssub.s32 1, %s448
        %s450 = smul.u32 10, %s449
        %p451 = scmp.eq.s32.totalorder %s32, 0
        // Predicated region
        $region53: #{tpu_custom_call.1} parent=35 // pred_check
          %p452 = pneg %p451
        $region54: #{tpu_custom_call.1} parent=35 // pred_check_branch
          %454 = sbr.rel (%p452) target = $region56
        $region55: #{tpu_custom_call.1} parent=35 // pred_region
          %455 = vst [vmem:[%s438] sm:$0xff] 0.0
          %456 = vst [vmem:[%s438 + $0x8] sm:$0xff] 0.0
          %457 = vst [vmem:[%s438 + $0x10] sm:$0xff] 0.0
          %458 = vst [vmem:[%s438 + $0x18] sm:$0xff] 0.0
        $region56: #{tpu_custom_call.1} parent=35 // pred_fallthru
          _
        %s459 = smul.u32 %s32, 8
        %v460 = vld [vmem:[%s368] sm:$0xff]
        %v461 = vld [vmem:[%s378] sm:$0xff]
        %v462 = vld [vmem:[%s388] sm:$0xff]
        %v463 = vld [vmem:[%s388 + $0x8] sm:$0xff]
        %v464 = vld [vmem:[%s388 + $0x10] sm:$0xff]
        %v465 = vld [vmem:[%s388 + $0x18] sm:$0xff]
        %v466 = vld [vmem:[%s388 + $0x20] sm:$0xff]
        %v467 = vld [vmem:[%s398] sm:$0xff]
        %v468 = vld [vmem:[%s398 + $0x8] sm:$0xff]
        %v469 = vld [vmem:[%s398 + $0x10] sm:$0xff]
        %v470 = vld [vmem:[%s398 + $0x18] sm:$0xff]
        %v471 = vld [vmem:[%s398 + $0x20] sm:$0xff]
        %v472 = vsub.f32 %v462, %v467
        %v473 = vsub.f32 %v463, %v468
        %v474 = vsub.f32 %v464, %v469
        %v475 = vsub.f32 %v465, %v470
        %v476 = vsub.f32 %v466, %v471
        %v477 = vand.u32 2147483647, %v472
        %v478 = vand.u32 2147483647, %v473
        %v479 = vand.u32 2147483647, %v474
        %v480 = vand.u32 2147483647, %v475
        %v481 = vand.u32 2147483647, %v476
        %v482 = vadd.f32 %v477, %v478
        %v483 = vadd.f32 %v482, %v479
        %v484 = vadd.f32 %v483, %v480
        %v485 = vadd.f32 %v484, %v481
        %v486 = vlaneseq
        %v487 = vshrl.u32 %v486, 7
        %s488 = sadd.s32 %s459, 0
        %v489 = vstv %s488
        %v490 = vadd.s32 %v489, %v487
        %vm491 = vcmp.lt.s32.totalorder %v490, 2
        %v492 = vsel %vm491, %v460, 0.0
        %v493 = vsel %vm491, %v461, 0.0
        %v494 = vsel %vm491, %v485, 0.0
        %v495 = vadd.f32 %v492, 0.0
        %v496 = vadd.f32 %v493, 0.0
        %v497 = vmul.f32 %v492, %v493
        %v498 = vadd.f32 %v497, 0.0
        %v499 = vmul.f32 %v494, %v492
        %v500 = vadd.f32 %v499, 0.0
        %v501 = vld [vmem:[%s438] sm:$0xff]
        %v502 = vadd.f32 %v501, %v495
        %503 = vst [vmem:[%s438] sm:$0xff] %v502
        %s504 = scalar_lea.vmem %s438, 8 [#allocation10]
        %v505 = vld [vmem:[%s504] sm:$0xff]
        %v506 = vadd.f32 %v505, %v496
        %507 = vst [vmem:[%s504] sm:$0xff] %v506
        %s508 = scalar_lea.vmem %s438, 16 [#allocation10]
        %v509 = vld [vmem:[%s508] sm:$0xff]
        %v510 = vadd.f32 %v509, %v498
        %511 = vst [vmem:[%s508] sm:$0xff] %v510
        %s512 = scalar_lea.vmem %s438, 24 [#allocation10]
        %v513 = vld [vmem:[%s512] sm:$0xff]
        %v514 = vadd.f32 %v513, %v500
        %515 = vst [vmem:[%s512] sm:$0xff] %v514
        %s516 = sand.u32 %s159, 1
        %s517 = scalar_lea.sflag [#allocation4], %s516
        %s518 = sand.u32 %s159, 1
        %s519 = smul.addr %s518, 32
        %s520 = scalar_lea.vmem [#allocation10], %s519
        // Predicated region
        $region57: #{tpu_custom_call.1} parent=35 // pred_check
          %p521 = pneg %p169
        $region58: #{tpu_custom_call.1} parent=35 // pred_check_branch
          %523 = sbr.rel (%p521) target = $region60
        $region59: #{tpu_custom_call.1} parent=35 // pred_region
          %525 = vsyncadd %s517, 0
          %s526 = smul.addr %s31, 4
          %s527 = smul.addr %s526, 8
          %s528 = scalar_lea.hbm %s4, %s527
          %s529 = sshll.u32 %s520, 4
          %s530 = int_to_ptr.vmem [resolvable:$true] %s529
          %s531 = sshll.u32 %s528, 4
          %s532 = int_to_ptr.hbm [resolvable:$true] %s531
          %537 = dma.vmem_to_hbm [thread:$0]  %s530, 512, %s532, %s517, 128, 128, 8
        $region60: #{tpu_custom_call.1} parent=35 // pred_fallthru
          _
      $region36: #{tpu_custom_call.1} parent=5 // pred_fallthru
        _
      %p538 = scmp.le.s32.totalorder 2, %s22
      // Predicated region
      $region61: #{tpu_custom_call.1} parent=5 // pred_check
        %p539 = pneg %p538
      $region62: #{tpu_custom_call.1} parent=5 // pred_check_branch
        %541 = sbr.rel (%p539) target = $region64
      $region63: #{tpu_custom_call.1} parent=5 // pred_region
        %s542 = ssub.s32 %s22, 2
        // Predicated region
        $region65: #{tpu_custom_call.1} parent=63 // pred_check
          %p543 = pneg %p175
        $region66: #{tpu_custom_call.1} parent=63 // pred_check_branch
          %545 = sbr.rel (%p543) target = $region68
        $region67: #{tpu_custom_call.1} parent=63 // pred_region
          %s546 = sand.u32 %s160, 1
          %s547 = scalar_lea.sflag [#allocation4], %s546
          %s548 = sand.u32 %s160, 1
          %s549 = smul.addr %s548, 32
          %s550 = scalar_lea.vmem [#allocation10], %s549
          %552 = dma.done %s547, 512
        $region68: #{tpu_custom_call.1} parent=63 // pred_fallthru
          _
      $region64: #{tpu_custom_call.1} parent=5 // pred_fallthru
        _
    $region6: #{tpu_custom_call.1} parent=1 // loop_footer
      %s26 = sadd.s32 1, %s22
    $region7: #{tpu_custom_call.1} parent=1 // loop_footer_branch
      %21 = sbr.rel target = $region3
    $region8: #{tpu_custom_call.1} parent=1 // loop_exit
      _
    %553 = vsyncpa [#allocation3], 1
    %s554 = scalar_lea.sflag [#allocation3], 1
    %555 = vsyncpa %s554, 1
    %556 = vsyncpa [#allocation6], 1
    %s557 = scalar_lea.sflag [#allocation6], 1
    %558 = vsyncpa %s557, 1
    %559 = vsyncpa [#allocation9], 1
    %s560 = scalar_lea.sflag [#allocation9], 1
    %561 = vsyncpa %s560, 1
    %562 = vsyncpa [#allocation4], 1
    %s563 = scalar_lea.sflag [#allocation4], 1
    %564 = vsyncpa %s563, 1

</llo_original>
